<compile_context>
chip_gen: v7x
topology: tpu7x:2x2x1
jax: 0.10.0
libtpu: 0.0.40
codegen_flags: <defaults>
</compile_context>

<pallas_src>
import functools

import numpy as np
import jax
import jax.numpy as jnp
from jax import lax
from jax.experimental import pallas as pl
from jax.experimental.pallas import tpu as pltpu

EPS = 1e-5


def _round_up(a, m):
    return ((a + m - 1) // m) * m


def bottleneck_kernel(x_ref, w1_ref, w2_ref, w3_ref, aff_ref, msk_ref,
                      o_ref, stk_ref, *, H, W, cneckp, cout):
    HW = H * W
    inv_hw = 1.0 / HW
    x = x_ref[...]                      # (C, HW) f32, one sample
    aff = aff_ref[...]                  # (R, 6) f32 packed gamma/beta
    msk = msk_ref[...]                  # (9, HW) f32, 1.0 = in-bounds tap
    g1, b1 = aff[:cneckp, 0:1], aff[:cneckp, 1:2]
    g2, b2 = aff[:cneckp, 2:3], aff[:cneckp, 3:4]
    g3, b3 = aff[:cout, 4:5], aff[:cout, 5:6]

    def inorm(v, g, b):
        # One pass: E[x] and E[x^2] reductions back-to-back (XLU has slack).
        mu = jnp.sum(v, axis=1, keepdims=True) * inv_hw
        ex2 = jnp.sum(v * v, axis=1, keepdims=True) * inv_hw
        var = ex2 - mu * mu
        return (v - mu) * lax.rsqrt(var + EPS) * g + b

    # ---- conv1x1 -> instance norm -> ReLU ----
    h = jnp.dot(w1_ref[...], x.astype(jnp.bfloat16),
                preferred_element_type=jnp.float32)
    # Padded neck rows (zero weights, zero gamma/beta) stay exactly 0 after norm.
    h = jnp.maximum(inorm(h, g1, b1), 0.0)          # (cneckp, HW) f32

    # ---- conv3x3 (pad=1, stride=1): im2col into bf16 tile-aligned scratch ----
    # Roll/mask math stays in f32 (v5e has no bf16 VALU); only the store is bf16.
    for k in range(9):
        dy, dx = k // 3 - 1, k % 3 - 1
        off = dy * W + dx
        if off == 0:
            t = h                                   # center tap: no roll, no mask
        else:
            t = pltpu.roll(h, shift=(-off) % HW, axis=1) * msk[k:k + 1, :]
        # cneckp is a multiple of 16 -> unmasked full-(16,128)-tile bf16 stores.
        stk_ref[k * cneckp:(k + 1) * cneckp, :] = t.astype(jnp.bfloat16)
    h = jnp.dot(w2_ref[...], stk_ref[...], preferred_element_type=jnp.float32)
    h = jnp.maximum(inorm(h, g2, b2), 0.0)

    # ---- conv1x1 -> norm -> residual add (identity projection: Cin == Cout) ----
    y = jnp.dot(w3_ref[...], h.astype(jnp.bfloat16),
                preferred_element_type=jnp.float32)
    o_ref[...] = inorm(y, g3, b3) + x


def bottleneck_block_ins(x, params):
    """x: (N, C, H, W) float32. params = (w1,g1,b1,w2,g2,b2,w3,g3,b3)."""
    (w1, g1, b1, w2, g2, b2, w3, g3, b3) = params
    N, C, H, W = x.shape
    Cneck = w1.shape[0]
    Cout = w3.shape[0]
    assert Cout == C, "only the identity-projection branch is implemented"
    HW = H * W

    CneckP = _round_up(Cneck, 16)       # bf16 sublane tile = 16 rows
    R = max(C, CneckP)

    # Free reshape -- NO HBM transpose on input or output.
    x3 = x.reshape(N, C, HW)

    # Zero-padded weights: neck dimension padded to CneckP so every scratch
    # store is tile-aligned; padded rows/cols contribute nothing to matmuls.
    w1p = (jnp.zeros((CneckP, C), jnp.float32).at[:Cneck].set(w1)
           .astype(jnp.bfloat16))
    w2t = jnp.transpose(w2, (0, 2, 3, 1))                    # (O, ky, kx, I)
    w2p = (jnp.zeros((CneckP, 3, 3, CneckP), jnp.float32)
           .at[:Cneck, :, :, :Cneck].set(w2t)
           .reshape(CneckP, 9 * CneckP).astype(jnp.bfloat16))
    w3p = (jnp.zeros((C, CneckP), jnp.float32).at[:, :Cneck].set(w3)
           .astype(jnp.bfloat16))

    # Pack all gammas/betas into one (R, 6) slab: [g1 b1 g2 b2 g3 b3], zero-padded.
    def _pad(v, r):
        return jnp.zeros((r,), jnp.float32).at[:v.shape[0]].set(
            v.astype(jnp.float32))

    aff = jnp.stack([_pad(g1, R), _pad(b1, R), _pad(g2, R), _pad(b2, R),
                     _pad(g3, R), _pad(b3, R)], axis=1)

    # Hoisted boundary masks for the 9 taps (built once on the host).
    pos = np.arange(HW)
    rr, cc = pos // W, pos % W
    msk_np = np.zeros((9, HW), np.float32)
    for k in range(9):
        dy, dx = k // 3 - 1, k % 3 - 1
        msk_np[k] = ((rr + dy >= 0) & (rr + dy < H) &
                     (cc + dx >= 0) & (cc + dx < W)).astype(np.float32)
    msk = jnp.asarray(msk_np)

    kern = functools.partial(bottleneck_kernel, H=H, W=W, cneckp=CneckP, cout=C)

    weight_bytes = 2 * (CneckP * C + CneckP * 9 * CneckP + C * CneckP)  # bf16
    flops = 2 * N * HW * (CneckP * C + 9 * CneckP * CneckP + C * CneckP)
    cost = pl.CostEstimate(
        flops=flops,
        transcendentals=N * (2 * CneckP + C),
        bytes_accessed=(2 * N * C * HW * 4          # x in + out
                        + weight_bytes              # bf16 weights
                        + (R * 6 + 9 * HW) * 4))    # affine + masks

    # Explicit VMEM budget: double-buffered x/out slabs + bf16 im2col scratch
    # + (double-buffered) weights/affine/masks, with 2x headroom.
    vmem_need = (2 * 2 * C * HW * 4 + 9 * CneckP * HW * 2
                 + 2 * weight_bytes + 2 * (R * 6 + 9 * HW) * 4)
    vmem_limit = int(min(32 << 20, max(16 << 20, 2 * vmem_need)))

    out = pl.pallas_call(
        kern,
        out_shape=jax.ShapeDtypeStruct((N, C, HW), jnp.float32),
        grid=(N,),                                  # >=2 steps for batch>=2 (v7x 2-TC)
        in_specs=[
            pl.BlockSpec((None, C, HW), lambda n: (n, 0, 0)),    # x, one sample
            pl.BlockSpec((CneckP, C), lambda n: (0, 0)),         # w1 (bf16)
            pl.BlockSpec((CneckP, 9 * CneckP), lambda n: (0, 0)),# w2 im2col (bf16)
            pl.BlockSpec((C, CneckP), lambda n: (0, 0)),         # w3 (bf16)
            pl.BlockSpec((R, 6), lambda n: (0, 0)),              # packed gamma/beta
            pl.BlockSpec((9, HW), lambda n: (0, 0)),             # tap masks
        ],
        out_specs=pl.BlockSpec((None, C, HW), lambda n: (n, 0, 0)),
        scratch_shapes=[pltpu.VMEM((9 * CneckP, HW), jnp.bfloat16)],  # im2col stack
        compiler_params=pltpu.CompilerParams(
            dimension_semantics=("parallel",),
            vmem_limit_bytes=vmem_limit),
        cost_estimate=cost,
    )(x3, w1p, w2p, w3p, aff, msk)
    return out.reshape(N, C, H, W)


# ----------------------- pure-JAX reference (for checking) -----------------------
def _expnorm_ref(x, g, b):
    mean = x.mean(axis=(2, 3), keepdims=True)
    var = ((x - mean) ** 2).mean(axis=(2, 3), keepdims=True)
    return ((x - mean) * lax.rsqrt(var + EPS)
            * g[None, :, None, None] + b[None, :, None, None])


def _conv_ref(x, w, pad):
    return lax.conv_general_dilated(
        x, w, window_strides=(1, 1), padding=[(pad, pad), (pad, pad)],
        dimension_numbers=("NCHW", "OIHW", "NCHW"),
        precision=lax.Precision.HIGHEST)


def ref_forward(x, params):
    (w1, g1, b1, w2, g2, b2, w3, g3, b3) = params
    h = _conv_ref(x, w1[:, :, None, None], 0)
    h = jax.nn.relu(_expnorm_ref(h, g1, b1))
    h = _conv_ref(h, w2, 1)
    h = jax.nn.relu(_expnorm_ref(h, g2, b2))
    h = _conv_ref(h, w3[:, :, None, None], 0)
    h = _expnorm_ref(h, g3, b3)
    return h + x


if __name__ == "__main__":
    key = jax.random.PRNGKey(0)
    N, C, H, W = 2, 16, 16, 16          # in_channel == out_channel == 16
    Cneck = C // 4                       # neck_reduction = 4

    ks = jax.random.split(key, 10)
    x = jax.random.normal(ks[0], (N, C, H, W), jnp.float32)
    w1 = 0.2 * jax.random.normal(ks[1], (Cneck, C), jnp.float32)
    w2 = 0.2 * jax.random.normal(ks[2], (Cneck, Cneck, 3, 3), jnp.float32)
    w3 = 0.2 * jax.random.normal(ks[3], (C, Cneck), jnp.float32)
    g1 = 1.0 + 0.1 * jax.random.normal(ks[4], (Cneck,), jnp.float32)
    b1 = 0.1 * jax.random.normal(ks[5], (Cneck,), jnp.float32)
    g2 = 1.0 + 0.1 * jax.random.normal(ks[6], (Cneck,), jnp.float32)
    b2 = 0.1 * jax.random.normal(ks[7], (Cneck,), jnp.float32)
    g3 = 1.0 + 0.1 * jax.random.normal(ks[8], (C,), jnp.float32)
    b3 = 0.1 * jax.random.normal(ks[9], (C,), jnp.float32)
    params = (w1, g1, b1, w2, g2, b2, w3, g3, b3)

    out = bottleneck_block_ins(x, params)
    jax.block_until_ready(out)

    ref = ref_forward(x, params)
    assert out.shape == ref.shape == (N, C, H, W)
    # Kernel matmuls run in bf16 (f32 accumulate); the reference uses
    # HIGHEST-precision f32 convs, so allow ~3% tolerance.
    if not np.allclose(np.asarray(out), np.asarray(ref), rtol=3e-2, atol=3e-2):
        raise AssertionError("Pallas kernel does not match JAX reference")
    print("KERNEL_OK")
</pallas_src>

<mosaic_0001>
module attributes {stable_mosaic.version = 11 : i64} {
  func.func @bottleneck_kernel(%arg0: i32, %arg1: memref<1x16x256xf32, #tpu.memory_space<vmem>>, %arg2: memref<16x16xbf16, #tpu.memory_space<vmem>>, %arg3: memref<16x144xbf16, #tpu.memory_space<vmem>>, %arg4: memref<16x16xbf16, #tpu.memory_space<vmem>>, %arg5: memref<16x6xf32, #tpu.memory_space<vmem>>, %arg6: memref<9x256xf32, #tpu.memory_space<vmem>>, %arg7: memref<1x16x256xf32, #tpu.memory_space<vmem>>, %arg8: memref<144x256xbf16, #tpu.memory_space<vmem>>) attributes {dimension_semantics = [#tpu.dimension_semantics<parallel>], iteration_bounds = array<i64: 2>, scalar_prefetch = 0 : i64, scratch_operands = 1 : i64, tpu.core_type = #tpu.core_type<tc>, window_params = [{transform_indices = @transform_0, window_bounds = array<i64: 1, 16, 256>}, {pipeline_mode = #tpu.pipeline_mode<synchronous>, transform_indices = @transform_1, window_bounds = array<i64: 16, 16>}, {pipeline_mode = #tpu.pipeline_mode<synchronous>, transform_indices = @transform_2, window_bounds = array<i64: 16, 144>}, {pipeline_mode = #tpu.pipeline_mode<synchronous>, transform_indices = @transform_3, window_bounds = array<i64: 16, 16>}, {pipeline_mode = #tpu.pipeline_mode<synchronous>, transform_indices = @transform_4, window_bounds = array<i64: 16, 6>}, {pipeline_mode = #tpu.pipeline_mode<synchronous>, transform_indices = @transform_5, window_bounds = array<i64: 9, 256>}, {transform_indices = @transform_6, window_bounds = array<i64: 1, 16, 256>}]} {
    %c0 = arith.constant 0 : index
    %c0_0 = arith.constant 0 : index
    %c0_1 = arith.constant 0 : index
    %0 = vector.load %arg1[%c0, %c0_0, %c0_1] : memref<1x16x256xf32, #tpu.memory_space<vmem>>, vector<1x16x256xf32>
    %1 = vector.shape_cast %0 : vector<1x16x256xf32> to vector<16x256xf32>
    %c0_2 = arith.constant 0 : index
    %c0_3 = arith.constant 0 : index
    %2 = vector.load %arg5[%c0_2, %c0_3] : memref<16x6xf32, #tpu.memory_space<vmem>>, vector<16x6xf32>
    %c0_4 = arith.constant 0 : index
    %c0_5 = arith.constant 0 : index
    %3 = vector.load %arg6[%c0_4, %c0_5] : memref<9x256xf32, #tpu.memory_space<vmem>>, vector<9x256xf32>
    %4 = vector.extract_strided_slice %2 {offsets = [0, 0], sizes = [16, 1], strides = [1, 1]} : vector<16x6xf32> to vector<16x1xf32>
    %5 = vector.extract_strided_slice %2 {offsets = [0, 1], sizes = [16, 1], strides = [1, 1]} : vector<16x6xf32> to vector<16x1xf32>
    %6 = vector.extract_strided_slice %2 {offsets = [0, 2], sizes = [16, 1], strides = [1, 1]} : vector<16x6xf32> to vector<16x1xf32>
    %7 = vector.extract_strided_slice %2 {offsets = [0, 3], sizes = [16, 1], strides = [1, 1]} : vector<16x6xf32> to vector<16x1xf32>
    %8 = vector.extract_strided_slice %2 {offsets = [0, 4], sizes = [16, 1], strides = [1, 1]} : vector<16x6xf32> to vector<16x1xf32>
    %9 = vector.extract_strided_slice %2 {offsets = [0, 5], sizes = [16, 1], strides = [1, 1]} : vector<16x6xf32> to vector<16x1xf32>
    %c0_6 = arith.constant 0 : index
    %c0_7 = arith.constant 0 : index
    %10 = vector.load %arg2[%c0_6, %c0_7] : memref<16x16xbf16, #tpu.memory_space<vmem>>, vector<16x16xbf16>
    %11 = arith.truncf %1 : vector<16x256xf32> to vector<16x256xbf16>
    %cst = arith.constant dense<0.000000e+00> : vector<16x256xf32>
    %12 = tpu.matmul %10, %11, %cst {dimension_numbers = #tpu.dot_dimension_numbers<[1], [0], [0], [1], [0, 0, 1, 1], [], []>} : vector<16x16xbf16>, vector<16x256xbf16>, vector<16x256xf32> -> vector<16x256xf32>
    %cst_8 = arith.constant dense<0.000000e+00> : vector<16xf32>
    %13 = vector.multi_reduction <add>, %12, %cst_8 [1] : vector<16x256xf32> to vector<16xf32>
    %14 = vector.shape_cast %13 : vector<16xf32> to vector<16x1xf32>
    %cst_9 = arith.constant 3.906250e-03 : f32
    %15 = vector.broadcast %cst_9 : f32 to vector<16x1xf32>
    %16 = arith.mulf %14, %15 : vector<16x1xf32>
    %17 = arith.mulf %12, %12 : vector<16x256xf32>
    %cst_10 = arith.constant dense<0.000000e+00> : vector<16xf32>
    %18 = vector.multi_reduction <add>, %17, %cst_10 [1] : vector<16x256xf32> to vector<16xf32>
    %19 = vector.shape_cast %18 : vector<16xf32> to vector<16x1xf32>
    %cst_11 = arith.constant 3.906250e-03 : f32
    %20 = vector.broadcast %cst_11 : f32 to vector<16x1xf32>
    %21 = arith.mulf %19, %20 : vector<16x1xf32>
    %22 = arith.mulf %16, %16 : vector<16x1xf32>
    %23 = arith.subf %21, %22 : vector<16x1xf32>
    %24 = vector.broadcast %16 : vector<16x1xf32> to vector<16x256xf32>
    %25 = arith.subf %12, %24 : vector<16x256xf32>
    %cst_12 = arith.constant 9.99999974E-6 : f32
    %26 = vector.broadcast %cst_12 : f32 to vector<16x1xf32>
    %27 = arith.addf %23, %26 : vector<16x1xf32>
    %28 = math.rsqrt %27 : vector<16x1xf32>
    %29 = vector.broadcast %28 : vector<16x1xf32> to vector<16x256xf32>
    %30 = arith.mulf %25, %29 : vector<16x256xf32>
    %31 = vector.broadcast %4 : vector<16x1xf32> to vector<16x256xf32>
    %32 = arith.mulf %30, %31 : vector<16x256xf32>
    %33 = vector.broadcast %5 : vector<16x1xf32> to vector<16x256xf32>
    %34 = arith.addf %32, %33 : vector<16x256xf32>
    %cst_13 = arith.constant 0.000000e+00 : f32
    %35 = vector.broadcast %cst_13 : f32 to vector<16x256xf32>
    %36 = arith.maximumf %34, %35 : vector<16x256xf32>
    %c17_i32 = arith.constant 17 : i32
    %37 = tpu.dynamic_rotate %36 by %c17_i32 dim 1 : vector<16x256xf32>, i32 -> vector<16x256xf32>
    %38 = vector.extract_strided_slice %3 {offsets = [0, 0], sizes = [1, 256], strides = [1, 1]} : vector<9x256xf32> to vector<1x256xf32>
    %39 = vector.broadcast %38 : vector<1x256xf32> to vector<16x256xf32>
    %40 = arith.mulf %37, %39 : vector<16x256xf32>
    %41 = arith.truncf %40 : vector<16x256xf32> to vector<16x256xbf16>
    %c0_14 = arith.constant 0 : index
    %c0_15 = arith.constant 0 : index
    %42 = vector.load %arg8[%c0_14, %c0_15] : memref<144x256xbf16, #tpu.memory_space<vmem>>, vector<16x256xbf16>
    tpu.vector_store %arg8[%c0_14, %c0_15], %41 {strides = array<i32>} : memref<144x256xbf16, #tpu.memory_space<vmem>>, vector<16x256xbf16>,
    %c16_i32 = arith.constant 16 : i32
    %43 = tpu.dynamic_rotate %36 by %c16_i32 dim 1 : vector<16x256xf32>, i32 -> vector<16x256xf32>
    %44 = vector.extract_strided_slice %3 {offsets = [1, 0], sizes = [1, 256], strides = [1, 1]} : vector<9x256xf32> to vector<1x256xf32>
    %45 = vector.broadcast %44 : vector<1x256xf32> to vector<16x256xf32>
    %46 = arith.mulf %43, %45 : vector<16x256xf32>
    %47 = arith.truncf %46 : vector<16x256xf32> to vector<16x256xbf16>
    %c16 = arith.constant 16 : index
    %c0_16 = arith.constant 0 : index
    %48 = vector.load %arg8[%c16, %c0_16] : memref<144x256xbf16, #tpu.memory_space<vmem>>, vector<16x256xbf16>
    tpu.vector_store %arg8[%c16, %c0_16], %47 {strides = array<i32>} : memref<144x256xbf16, #tpu.memory_space<vmem>>, vector<16x256xbf16>,
    %c15_i32 = arith.constant 15 : i32
    %49 = tpu.dynamic_rotate %36 by %c15_i32 dim 1 : vector<16x256xf32>, i32 -> vector<16x256xf32>
    %50 = vector.extract_strided_slice %3 {offsets = [2, 0], sizes = [1, 256], strides = [1, 1]} : vector<9x256xf32> to vector<1x256xf32>
    %51 = vector.broadcast %50 : vector<1x256xf32> to vector<16x256xf32>
    %52 = arith.mulf %49, %51 : vector<16x256xf32>
    %53 = arith.truncf %52 : vector<16x256xf32> to vector<16x256xbf16>
    %c32 = arith.constant 32 : index
    %c0_17 = arith.constant 0 : index
    %54 = vector.load %arg8[%c32, %c0_17] : memref<144x256xbf16, #tpu.memory_space<vmem>>, vector<16x256xbf16>
    tpu.vector_store %arg8[%c32, %c0_17], %53 {strides = array<i32>} : memref<144x256xbf16, #tpu.memory_space<vmem>>, vector<16x256xbf16>,
    %c1_i32 = arith.constant 1 : i32
    %55 = tpu.dynamic_rotate %36 by %c1_i32 dim 1 : vector<16x256xf32>, i32 -> vector<16x256xf32>
    %56 = vector.extract_strided_slice %3 {offsets = [3, 0], sizes = [1, 256], strides = [1, 1]} : vector<9x256xf32> to vector<1x256xf32>
    %57 = vector.broadcast %56 : vector<1x256xf32> to vector<16x256xf32>
    %58 = arith.mulf %55, %57 : vector<16x256xf32>
    %59 = arith.truncf %58 : vector<16x256xf32> to vector<16x256xbf16>
    %c48 = arith.constant 48 : index
    %c0_18 = arith.constant 0 : index
    %60 = vector.load %arg8[%c48, %c0_18] : memref<144x256xbf16, #tpu.memory_space<vmem>>, vector<16x256xbf16>
    tpu.vector_store %arg8[%c48, %c0_18], %59 {strides = array<i32>} : memref<144x256xbf16, #tpu.memory_space<vmem>>, vector<16x256xbf16>,
    %61 = arith.truncf %36 : vector<16x256xf32> to vector<16x256xbf16>
    %c64 = arith.constant 64 : index
    %c0_19 = arith.constant 0 : index
    %62 = vector.load %arg8[%c64, %c0_19] : memref<144x256xbf16, #tpu.memory_space<vmem>>, vector<16x256xbf16>
    tpu.vector_store %arg8[%c64, %c0_19], %61 {strides = array<i32>} : memref<144x256xbf16, #tpu.memory_space<vmem>>, vector<16x256xbf16>,
    %c255_i32 = arith.constant 255 : i32
    %63 = tpu.dynamic_rotate %36 by %c255_i32 dim 1 : vector<16x256xf32>, i32 -> vector<16x256xf32>
    %64 = vector.extract_strided_slice %3 {offsets = [5, 0], sizes = [1, 256], strides = [1, 1]} : vector<9x256xf32> to vector<1x256xf32>
    %65 = vector.broadcast %64 : vector<1x256xf32> to vector<16x256xf32>
    %66 = arith.mulf %63, %65 : vector<16x256xf32>
    %67 = arith.truncf %66 : vector<16x256xf32> to vector<16x256xbf16>
    %c80 = arith.constant 80 : index
    %c0_20 = arith.constant 0 : index
    %68 = vector.load %arg8[%c80, %c0_20] : memref<144x256xbf16, #tpu.memory_space<vmem>>, vector<16x256xbf16>
    tpu.vector_store %arg8[%c80, %c0_20], %67 {strides = array<i32>} : memref<144x256xbf16, #tpu.memory_space<vmem>>, vector<16x256xbf16>,
    %c241_i32 = arith.constant 241 : i32
    %69 = tpu.dynamic_rotate %36 by %c241_i32 dim 1 : vector<16x256xf32>, i32 -> vector<16x256xf32>
    %70 = vector.extract_strided_slice %3 {offsets = [6, 0], sizes = [1, 256], strides = [1, 1]} : vector<9x256xf32> to vector<1x256xf32>
    %71 = vector.broadcast %70 : vector<1x256xf32> to vector<16x256xf32>
    %72 = arith.mulf %69, %71 : vector<16x256xf32>
    %73 = arith.truncf %72 : vector<16x256xf32> to vector<16x256xbf16>
    %c96 = arith.constant 96 : index
    %c0_21 = arith.constant 0 : index
    %74 = vector.load %arg8[%c96, %c0_21] : memref<144x256xbf16, #tpu.memory_space<vmem>>, vector<16x256xbf16>
    tpu.vector_store %arg8[%c96, %c0_21], %73 {strides = array<i32>} : memref<144x256xbf16, #tpu.memory_space<vmem>>, vector<16x256xbf16>,
    %c240_i32 = arith.constant 240 : i32
    %75 = tpu.dynamic_rotate %36 by %c240_i32 dim 1 : vector<16x256xf32>, i32 -> vector<16x256xf32>
    %76 = vector.extract_strided_slice %3 {offsets = [7, 0], sizes = [1, 256], strides = [1, 1]} : vector<9x256xf32> to vector<1x256xf32>
    %77 = vector.broadcast %76 : vector<1x256xf32> to vector<16x256xf32>
    %78 = arith.mulf %75, %77 : vector<16x256xf32>
    %79 = arith.truncf %78 : vector<16x256xf32> to vector<16x256xbf16>
    %c112 = arith.constant 112 : index
    %c0_22 = arith.constant 0 : index
    %80 = vector.load %arg8[%c112, %c0_22] : memref<144x256xbf16, #tpu.memory_space<vmem>>, vector<16x256xbf16>
    tpu.vector_store %arg8[%c112, %c0_22], %79 {strides = array<i32>} : memref<144x256xbf16, #tpu.memory_space<vmem>>, vector<16x256xbf16>,
    %c239_i32 = arith.constant 239 : i32
    %81 = tpu.dynamic_rotate %36 by %c239_i32 dim 1 : vector<16x256xf32>, i32 -> vector<16x256xf32>
    %82 = vector.extract_strided_slice %3 {offsets = [8, 0], sizes = [1, 256], strides = [1, 1]} : vector<9x256xf32> to vector<1x256xf32>
    %83 = vector.broadcast %82 : vector<1x256xf32> to vector<16x256xf32>
    %84 = arith.mulf %81, %83 : vector<16x256xf32>
    %85 = arith.truncf %84 : vector<16x256xf32> to vector<16x256xbf16>
    %c128 = arith.constant 128 : index
    %c0_23 = arith.constant 0 : index
    %86 = vector.load %arg8[%c128, %c0_23] : memref<144x256xbf16, #tpu.memory_space<vmem>>, vector<16x256xbf16>
    tpu.vector_store %arg8[%c128, %c0_23], %85 {strides = array<i32>} : memref<144x256xbf16, #tpu.memory_space<vmem>>, vector<16x256xbf16>,
    %c0_24 = arith.constant 0 : index
    %c0_25 = arith.constant 0 : index
    %87 = vector.load %arg3[%c0_24, %c0_25] : memref<16x144xbf16, #tpu.memory_space<vmem>>, vector<16x144xbf16>
    %c0_26 = arith.constant 0 : index
    %c0_27 = arith.constant 0 : index
    %88 = vector.load %arg8[%c0_26, %c0_27] : memref<144x256xbf16, #tpu.memory_space<vmem>>, vector<144x256xbf16>
    %cst_28 = arith.constant dense<0.000000e+00> : vector<16x256xf32>
    %89 = tpu.matmul %87, %88, %cst_28 {dimension_numbers = #tpu.dot_dimension_numbers<[1], [0], [0], [1], [0, 0, 1, 1], [], []>} : vector<16x144xbf16>, vector<144x256xbf16>, vector<16x256xf32> -> vector<16x256xf32>
    %cst_29 = arith.constant dense<0.000000e+00> : vector<16xf32>
    %90 = vector.multi_reduction <add>, %89, %cst_29 [1] : vector<16x256xf32> to vector<16xf32>
    %91 = vector.shape_cast %90 : vector<16xf32> to vector<16x1xf32>
    %cst_30 = arith.constant 3.906250e-03 : f32
    %92 = vector.broadcast %cst_30 : f32 to vector<16x1xf32>
    %93 = arith.mulf %91, %92 : vector<16x1xf32>
    %94 = arith.mulf %89, %89 : vector<16x256xf32>
    %cst_31 = arith.constant dense<0.000000e+00> : vector<16xf32>
    %95 = vector.multi_reduction <add>, %94, %cst_31 [1] : vector<16x256xf32> to vector<16xf32>
    %96 = vector.shape_cast %95 : vector<16xf32> to vector<16x1xf32>
    %cst_32 = arith.constant 3.906250e-03 : f32
    %97 = vector.broadcast %cst_32 : f32 to vector<16x1xf32>
    %98 = arith.mulf %96, %97 : vector<16x1xf32>
    %99 = arith.mulf %93, %93 : vector<16x1xf32>
    %100 = arith.subf %98, %99 : vector<16x1xf32>
    %101 = vector.broadcast %93 : vector<16x1xf32> to vector<16x256xf32>
    %102 = arith.subf %89, %101 : vector<16x256xf32>
    %cst_33 = arith.constant 9.99999974E-6 : f32
    %103 = vector.broadcast %cst_33 : f32 to vector<16x1xf32>
    %104 = arith.addf %100, %103 : vector<16x1xf32>
    %105 = math.rsqrt %104 : vector<16x1xf32>
    %106 = vector.broadcast %105 : vector<16x1xf32> to vector<16x256xf32>
    %107 = arith.mulf %102, %106 : vector<16x256xf32>
    %108 = vector.broadcast %6 : vector<16x1xf32> to vector<16x256xf32>
    %109 = arith.mulf %107, %108 : vector<16x256xf32>
    %110 = vector.broadcast %7 : vector<16x1xf32> to vector<16x256xf32>
    %111 = arith.addf %109, %110 : vector<16x256xf32>
    %cst_34 = arith.constant 0.000000e+00 : f32
    %112 = vector.broadcast %cst_34 : f32 to vector<16x256xf32>
    %113 = arith.maximumf %111, %112 : vector<16x256xf32>
    %c0_35 = arith.constant 0 : index
    %c0_36 = arith.constant 0 : index
    %114 = vector.load %arg4[%c0_35, %c0_36] : memref<16x16xbf16, #tpu.memory_space<vmem>>, vector<16x16xbf16>
    %115 = arith.truncf %113 : vector<16x256xf32> to vector<16x256xbf16>
    %cst_37 = arith.constant dense<0.000000e+00> : vector<16x256xf32>
    %116 = tpu.matmul %114, %115, %cst_37 {dimension_numbers = #tpu.dot_dimension_numbers<[1], [0], [0], [1], [0, 0, 1, 1], [], []>} : vector<16x16xbf16>, vector<16x256xbf16>, vector<16x256xf32> -> vector<16x256xf32>
    %cst_38 = arith.constant dense<0.000000e+00> : vector<16xf32>
    %117 = vector.multi_reduction <add>, %116, %cst_38 [1] : vector<16x256xf32> to vector<16xf32>
    %118 = vector.shape_cast %117 : vector<16xf32> to vector<16x1xf32>
    %cst_39 = arith.constant 3.906250e-03 : f32
    %119 = vector.broadcast %cst_39 : f32 to vector<16x1xf32>
    %120 = arith.mulf %118, %119 : vector<16x1xf32>
    %121 = arith.mulf %116, %116 : vector<16x256xf32>
    %cst_40 = arith.constant dense<0.000000e+00> : vector<16xf32>
    %122 = vector.multi_reduction <add>, %121, %cst_40 [1] : vector<16x256xf32> to vector<16xf32>
    %123 = vector.shape_cast %122 : vector<16xf32> to vector<16x1xf32>
    %cst_41 = arith.constant 3.906250e-03 : f32
    %124 = vector.broadcast %cst_41 : f32 to vector<16x1xf32>
    %125 = arith.mulf %123, %124 : vector<16x1xf32>
    %126 = arith.mulf %120, %120 : vector<16x1xf32>
    %127 = arith.subf %125, %126 : vector<16x1xf32>
    %128 = vector.broadcast %120 : vector<16x1xf32> to vector<16x256xf32>
    %129 = arith.subf %116, %128 : vector<16x256xf32>
    %cst_42 = arith.constant 9.99999974E-6 : f32
    %130 = vector.broadcast %cst_42 : f32 to vector<16x1xf32>
    %131 = arith.addf %127, %130 : vector<16x1xf32>
    %132 = math.rsqrt %131 : vector<16x1xf32>
    %133 = vector.broadcast %132 : vector<16x1xf32> to vector<16x256xf32>
    %134 = arith.mulf %129, %133 : vector<16x256xf32>
    %135 = vector.broadcast %8 : vector<16x1xf32> to vector<16x256xf32>
    %136 = arith.mulf %134, %135 : vector<16x256xf32>
    %137 = vector.broadcast %9 : vector<16x1xf32> to vector<16x256xf32>
    %138 = arith.addf %136, %137 : vector<16x256xf32>
    %139 = arith.addf %138, %1 : vector<16x256xf32>
    %c0_43 = arith.constant 0 : index
    %c0_44 = arith.constant 0 : index
    %c0_45 = arith.constant 0 : index
    %140 = vector.load %arg7[%c0_43, %c0_44, %c0_45] : memref<1x16x256xf32, #tpu.memory_space<vmem>>, vector<1x16x256xf32>
    %141 = vector.shape_cast %140 : vector<1x16x256xf32> to vector<16x256xf32>
    %142 = vector.shape_cast %139 : vector<16x256xf32> to vector<1x16x256xf32>
    tpu.vector_store %arg7[%c0_43, %c0_44, %c0_45], %142 {strides = array<i32>} : memref<1x16x256xf32, #tpu.memory_space<vmem>>, vector<1x16x256xf32>,
    return
  }
  func.func @transform_0(%arg0: i32) -> (i32, i32, i32) {
    %c0_i32 = arith.constant 0 : i32
    %c0_i32_0 = arith.constant 0 : i32
    %c0_i32_1 = arith.constant 0 : i32
    return %arg0, %c0_i32, %c0_i32_0 : i32, i32, i32
  }
  func.func @transform_1(%arg0: i32) -> (i32, i32) {
    %c0_i32 = arith.constant 0 : i32
    %c0_i32_0 = arith.constant 0 : i32
    %c0_i32_1 = arith.constant 0 : i32
    return %c0_i32, %c0_i32_0 : i32, i32
  }
  func.func @transform_2(%arg0: i32) -> (i32, i32) {
    %c0_i32 = arith.constant 0 : i32
    %c0_i32_0 = arith.constant 0 : i32
    %c0_i32_1 = arith.constant 0 : i32
    return %c0_i32, %c0_i32_0 : i32, i32
  }
  func.func @transform_3(%arg0: i32) -> (i32, i32) {
    %c0_i32 = arith.constant 0 : i32
    %c0_i32_0 = arith.constant 0 : i32
    %c0_i32_1 = arith.constant 0 : i32
    return %c0_i32, %c0_i32_0 : i32, i32
  }
  func.func @transform_4(%arg0: i32) -> (i32, i32) {
    %c0_i32 = arith.constant 0 : i32
    %c0_i32_0 = arith.constant 0 : i32
    %c0_i32_1 = arith.constant 0 : i32
    return %c0_i32, %c0_i32_0 : i32, i32
  }
  func.func @transform_5(%arg0: i32) -> (i32, i32) {
    %c0_i32 = arith.constant 0 : i32
    %c0_i32_0 = arith.constant 0 : i32
    %c0_i32_1 = arith.constant 0 : i32
    return %c0_i32, %c0_i32_0 : i32, i32
  }
  func.func @transform_6(%arg0: i32) -> (i32, i32, i32) {
    %c0_i32 = arith.constant 0 : i32
    %c0_i32_0 = arith.constant 0 : i32
    %c0_i32_1 = arith.constant 0 : i32
    return %arg0, %c0_i32, %c0_i32_0 : i32, i32, i32
  }
}

</mosaic_0001>

<llo_original>
// kernel: tpu_custom_call.1
$region0: #{tpu_custom_call.1}
  #allocation0 [shape = 'u32[]', space=smem, size = 0x4, offset = 0x4, fixed_abs, tag = 'smem constant byte address 0x4 - core index']
  #allocation1 [shape = 'u32[144,128]{1,0:T(1,128)}', space=vmem, size = 0x12000, scoped, tag = 'internal scratch']
  #allocation2 [shape = 'bf16[144,256]{1,0:T(16,128)(2,1)}', space=vmem, size = 0x12000, scoped, tag = 'scratch operand']
  %s0 = inlined_call_operand.hbm [shape: f32[2,16,256], index: 0, kind: input, shape index: {}]
  %s1 = inlined_call_operand.vmem [shape: bf16[16,16], index: 1, kind: input, shape index: {}]
  %s2 = inlined_call_operand.hbm [shape: bf16[16,144], index: 2, kind: input, shape index: {}]
  %s3 = inlined_call_operand.hbm [shape: bf16[16,16], index: 3, kind: input, shape index: {}]
  %s4 = inlined_call_operand.vmem [shape: f32[16,6], index: 4, kind: input, shape index: {}]
  %s5 = inlined_call_operand.vmem [shape: f32[9,256], index: 5, kind: input, shape index: {}]
  %s6 = inlined_call_operand.hbm [shape: f32[2,16,256], index: 6, kind: output, shape index: {}]
  %s7 = sld [smem:[#allocation0]]
  $region69: #{tpu_custom_call.1} parent=0
    _
  %s9 = ssub.s32 1, %s7
  %s10 = scalar_select 0, %s9, %s7
  $region1: #{tpu_custom_call.1} parent=0
    #allocation3 [shape = 'u8[32768]{0}', space=vmem, size = 0x8000, scoped, tag = 'input window, operand 0']
    #allocation4 [shape = 's32[2]{0}', space=sflag, size = 0x8, scoped, tag = 'scoped memory for tpu_custom_call.1']
    #allocation5 [shape = 's32[2]{0}', space=sflag, size = 0x8, scoped, tag = 'scoped memory for tpu_custom_call.1']
    #allocation6 [shape = 'u8[8192]{0}', space=vmem, size = 0x2000, scoped, tag = 'input window, operand 2, single buffered']
    #allocation7 [shape = 's32[1]{0}', space=sflag, size = 0x4, scoped, tag = 'scoped memory for tpu_custom_call.1']
    #allocation8 [shape = 'u8[4096]{0}', space=vmem, size = 0x1000, scoped, tag = 'input window, operand 3, single buffered']
    #allocation9 [shape = 'u8[32768]{0}', space=vmem, size = 0x8000, scoped, tag = 'output window, operand 0']
    %11 = vsyncpa [#allocation4], 0
    %s12 = scalar_lea.sflag [#allocation4], 1
    %13 = vsyncpa %s12, 0
    %14 = vsyncpa [#allocation7], 0
    %15 = vsyncpa [#allocation5], 0
    %s16 = scalar_lea.sflag [#allocation5], 1
    %17 = vsyncpa %s16, 0
    loop: start=0, step=1, limit=4
    $region2: #{tpu_custom_call.1} parent=1 // loop_pre_header
      _
    $region3: #{tpu_custom_call.1} parent=1 // loop_header
      %s19 = sphi 0, %s23
      %p20 = scmp.ge.s32.totalorder %s19, 4
      %s29 = sphi 0, %s31
      %s32 = sphi 0, %s29
      %s33 = sphi 0, %s32
      %s49 = sphi 0, %s33
      %s53 = sphi 0, %s53
      %s55 = sphi 0, %s53
      %s56 = sphi 0, %s55
      %s70 = sphi 0, %s56
      %s74 = sphi 0, %s74
      %s76 = sphi 0, %s74
      %s77 = sphi 0, %s76
      %s91 = sphi 0, %s77
      %s95 = sphi 0, %s95
      %s97 = sphi 0, %s95
      %s98 = sphi 0, %s97
      %s112 = sphi 0, %s98
      %s116 = sphi 0, %s116
      %s118 = sphi 0, %s116
      %s119 = sphi 0, %s118
      %s133 = sphi 0, %s119
      %s137 = sphi 0, %s137
      %s139 = sphi 0, %s137
      %s140 = sphi 0, %s139
      %s154 = sphi 0, %s140
      %s160 = sphi 0, %s162
      %s163 = sphi 0, %s160
      %s164 = sphi 0, %s163
      %s180 = sphi 0, %s164
    $region4: #{tpu_custom_call.1} parent=1 // loop_header_branch
      %22 = sbr.rel (%p20) target = $region8
    $region5: #{tpu_custom_call.1} parent=1 // loop_body
      %s24 = ssub.s32 %s19, 1
      %s25 = ssub.s32 %s19, 2
      %s26 = sadd.s32 %s19, 1
      %s27 = ssub.s32 %s19, %s26
      %p28 = scmp.eq.s32.totalorder %s27, 0
      %s30 = sadd.s32 %s29, 1
      %s31 = scalar_select %p28, %s29, %s30
      %p34 = pneg %p28
      %p35 = scmp.eq.s32.totalorder %s19, 1
      %p36 = por %p34, %p35
      %p37 = scmp.ne.s32.totalorder %s29, %s32
      %p38 = scmp.eq.s32.totalorder %s19, 0
      %p39 = por %p37, %p38
      %p40 = scmp.ne.s32.totalorder %s29, %s32
      %p41 = scmp.eq.s32.totalorder %s24, 1
      %p42 = por %p40, %p41
      %p43 = scmp.ne.s32.totalorder %s32, %s33
      %p44 = scmp.eq.s32.totalorder %s24, 0
      %p45 = por %p43, %p44
      %p46 = scmp.ne.s32.totalorder %s32, %s33
      %p47 = scmp.eq.s32.totalorder %s25, 1
      %p48 = por %p46, %p47
      %p50 = scmp.ne.s32.totalorder %s33, %s49
      %p51 = scmp.eq.s32.totalorder %s25, 0
      %p52 = por %p50, %p51
      %s54 = sadd.s32 %s53, 1
      %p57 = scmp.eq.s32.totalorder %s19, 1
      %p58 = scmp.ne.s32.totalorder %s53, %s55
      %p59 = scmp.eq.s32.totalorder %s19, 0
      %p60 = por %p58, %p59
      %p61 = scmp.ne.s32.totalorder %s53, %s55
      %p62 = scmp.eq.s32.totalorder %s24, 1
      %p63 = por %p61, %p62
      %p64 = scmp.ne.s32.totalorder %s55, %s56
      %p65 = scmp.eq.s32.totalorder %s24, 0
      %p66 = por %p64, %p65
      %p67 = scmp.ne.s32.totalorder %s55, %s56
      %p68 = scmp.eq.s32.totalorder %s25, 1
      %p69 = por %p67, %p68
      %p71 = scmp.ne.s32.totalorder %s56, %s70
      %p72 = scmp.eq.s32.totalorder %s25, 0
      %p73 = por %p71, %p72
      %s75 = sadd.s32 %s74, 1
      %p78 = scmp.eq.s32.totalorder %s19, 1
      %p79 = scmp.ne.s32.totalorder %s74, %s76
      %p80 = scmp.eq.s32.totalorder %s19, 0
      %p81 = por %p79, %p80
      %p82 = scmp.ne.s32.totalorder %s74, %s76
      %p83 = scmp.eq.s32.totalorder %s24, 1
      %p84 = por %p82, %p83
      %p85 = scmp.ne.s32.totalorder %s76, %s77
      %p86 = scmp.eq.s32.totalorder %s24, 0
      %p87 = por %p85, %p86
      %p88 = scmp.ne.s32.totalorder %s76, %s77
      %p89 = scmp.eq.s32.totalorder %s25, 1
      %p90 = por %p88, %p89
      %p92 = scmp.ne.s32.totalorder %s77, %s91
      %p93 = scmp.eq.s32.totalorder %s25, 0
      %p94 = por %p92, %p93
      %s96 = sadd.s32 %s95, 1
      %p99 = scmp.eq.s32.totalorder %s19, 1
      %p100 = scmp.ne.s32.totalorder %s95, %s97
      %p101 = scmp.eq.s32.totalorder %s19, 0
      %p102 = por %p100, %p101
      %p103 = scmp.ne.s32.totalorder %s95, %s97
      %p104 = scmp.eq.s32.totalorder %s24, 1
      %p105 = por %p103, %p104
      %p106 = scmp.ne.s32.totalorder %s97, %s98
      %p107 = scmp.eq.s32.totalorder %s24, 0
      %p108 = por %p106, %p107
      %p109 = scmp.ne.s32.totalorder %s97, %s98
      %p110 = scmp.eq.s32.totalorder %s25, 1
      %p111 = por %p109, %p110
      %p113 = scmp.ne.s32.totalorder %s98, %s112
      %p114 = scmp.eq.s32.totalorder %s25, 0
      %p115 = por %p113, %p114
      %s117 = sadd.s32 %s116, 1
      %p120 = scmp.eq.s32.totalorder %s19, 1
      %p121 = scmp.ne.s32.totalorder %s116, %s118
      %p122 = scmp.eq.s32.totalorder %s19, 0
      %p123 = por %p121, %p122
      %p124 = scmp.ne.s32.totalorder %s116, %s118
      %p125 = scmp.eq.s32.totalorder %s24, 1
      %p126 = por %p124, %p125
      %p127 = scmp.ne.s32.totalorder %s118, %s119
      %p128 = scmp.eq.s32.totalorder %s24, 0
      %p129 = por %p127, %p128
      %p130 = scmp.ne.s32.totalorder %s118, %s119
      %p131 = scmp.eq.s32.totalorder %s25, 1
      %p132 = por %p130, %p131
      %p134 = scmp.ne.s32.totalorder %s119, %s133
      %p135 = scmp.eq.s32.totalorder %s25, 0
      %p136 = por %p134, %p135
      %s138 = sadd.s32 %s137, 1
      %p141 = scmp.eq.s32.totalorder %s19, 1
      %p142 = scmp.ne.s32.totalorder %s137, %s139
      %p143 = scmp.eq.s32.totalorder %s19, 0
      %p144 = por %p142, %p143
      %p145 = scmp.ne.s32.totalorder %s137, %s139
      %p146 = scmp.eq.s32.totalorder %s24, 1
      %p147 = por %p145, %p146
      %p148 = scmp.ne.s32.totalorder %s139, %s140
      %p149 = scmp.eq.s32.totalorder %s24, 0
      %p150 = por %p148, %p149
      %p151 = scmp.ne.s32.totalorder %s139, %s140
      %p152 = scmp.eq.s32.totalorder %s25, 1
      %p153 = por %p151, %p152
      %p155 = scmp.ne.s32.totalorder %s140, %s154
      %p156 = scmp.eq.s32.totalorder %s25, 0
      %p157 = por %p155, %p156
      %s158 = ssub.s32 %s19, %s26
      %p159 = scmp.eq.s32.totalorder %s158, 0
      %s161 = sadd.s32 %s160, 1
      %s162 = scalar_select %p159, %s160, %s161
      %p165 = pneg %p159
      %p166 = scmp.eq.s32.totalorder %s19, 1
      %p167 = por %p165, %p166
      %p168 = scmp.ne.s32.totalorder %s160, %s163
      %p169 = scmp.eq.s32.totalorder %s19, 0
      %p170 = por %p168, %p169
      %p171 = scmp.ne.s32.totalorder %s160, %s163
      %p172 = scmp.eq.s32.totalorder %s24, 1
      %p173 = por %p171, %p172
      %p174 = scmp.ne.s32.totalorder %s163, %s164
      %p175 = scmp.eq.s32.totalorder %s24, 0
      %p176 = por %p174, %p175
      %p177 = scmp.ne.s32.totalorder %s163, %s164
      %p178 = scmp.eq.s32.totalorder %s25, 1
      %p179 = por %p177, %p178
      %p181 = scmp.ne.s32.totalorder %s164, %s180
      %p182 = scmp.eq.s32.totalorder %s25, 0
      %p183 = por %p181, %p182
      %p184 = scmp.le.s32.totalorder 1, %s19
      %p185 = scmp.lt.s32.totalorder %s19, 3
      %p186 = pnand %p184, %p185
      %p187 = pneg %p186
      // Predicated region
      $region9: #{tpu_custom_call.1} parent=5 // pred_check
        _
      $region10: #{tpu_custom_call.1} parent=5 // pred_check_branch
        %189 = sbr.rel (%p186) target = $region12
      $region11: #{tpu_custom_call.1} parent=5 // pred_region
        %s190 = ssub.s32 %s19, 1
        // Predicated region
        $region13: #{tpu_custom_call.1} parent=11 // pred_check
          %p191 = pneg %p66
        $region14: #{tpu_custom_call.1} parent=11 // pred_check_branch
          %193 = sbr.rel (%p191) target = $region16
        $region15: #{tpu_custom_call.1} parent=11 // pred_region
          _
        $region16: #{tpu_custom_call.1} parent=11 // pred_fallthru
          _
        // Predicated region
        $region17: #{tpu_custom_call.1} parent=11 // pred_check
          %p194 = pneg %p87
        $region18: #{tpu_custom_call.1} parent=11 // pred_check_branch
          %196 = sbr.rel (%p194) target = $region20
        $region19: #{tpu_custom_call.1} parent=11 // pred_region
          %s198 = ssub.s32 256, 256
          %199 = vsyncadd [#allocation7], %s198
          %s200 = sshll.u32 [#allocation6], 4
          %s201 = int_to_ptr.vmem [resolvable:$true] %s200
          %206 = dma.hbm_to_vmem [thread:$0]  %s2, 256, %s201, [#allocation7], 128, 128, 8
        $region20: #{tpu_custom_call.1} parent=11 // pred_fallthru
          _
        // Predicated region
        $region21: #{tpu_custom_call.1} parent=11 // pred_check
          %p207 = pneg %p108
        $region22: #{tpu_custom_call.1} parent=11 // pred_check_branch
          %209 = sbr.rel (%p207) target = $region24
        $region23: #{tpu_custom_call.1} parent=11 // pred_region
          %s211 = ssub.s32 128, 128
          %212 = vsyncadd [#allocation7], %s211
          %s213 = sshll.u32 [#allocation8], 4
          %s214 = int_to_ptr.vmem [resolvable:$true] %s213
          %219 = dma.hbm_to_vmem [thread:$0]  %s3, 128, %s214, [#allocation7], 64, 64, 4
        $region24: #{tpu_custom_call.1} parent=11 // pred_fallthru
          _
        // Predicated region
        $region25: #{tpu_custom_call.1} parent=11 // pred_check
          %p220 = pneg %p129
        $region26: #{tpu_custom_call.1} parent=11 // pred_check_branch
          %222 = sbr.rel (%p220) target = $region28
        $region27: #{tpu_custom_call.1} parent=11 // pred_region
          _
        $region28: #{tpu_custom_call.1} parent=11 // pred_fallthru
          _
        // Predicated region
        $region29: #{tpu_custom_call.1} parent=11 // pred_check
          %p223 = pneg %p150
        $region30: #{tpu_custom_call.1} parent=11 // pred_check_branch
          %225 = sbr.rel (%p223) target = $region32
        $region31: #{tpu_custom_call.1} parent=11 // pred_region
          _
        $region32: #{tpu_custom_call.1} parent=11 // pred_fallthru
          _
      $region12: #{tpu_custom_call.1} parent=5 // pred_fallthru
        _
      %p226 = scmp.lt.s32.totalorder %s19, 2
      // Predicated region
      $region33: #{tpu_custom_call.1} parent=5 // pred_check
        %p227 = pneg %p226
      $region34: #{tpu_custom_call.1} parent=5 // pred_check_branch
        %229 = sbr.rel (%p227) target = $region36
      $region35: #{tpu_custom_call.1} parent=5 // pred_region
        // Predicated region
        $region37: #{tpu_custom_call.1} parent=35 // pred_check
          %p230 = pneg %p39
        $region38: #{tpu_custom_call.1} parent=35 // pred_check_branch
          %232 = sbr.rel (%p230) target = $region40
        $region39: #{tpu_custom_call.1} parent=35 // pred_region
          %s233 = sand.u32 %s29, 1
          %s234 = scalar_lea.sflag [#allocation4], %s233
          %s235 = sand.u32 %s29, 1
          %s236 = smul.addr %s235, 32
          %s237 = scalar_lea.vmem [#allocation3], %s236
          %s239 = ssub.s32 512, 512
          %240 = vsyncadd %s234, %s239
          %s241 = smul.addr %s19, 4
          %s242 = smul.addr %s241, 128
          %s243 = scalar_lea.hbm %s0, %s242
          %s244 = sshll.u32 %s237, 4
          %s245 = int_to_ptr.vmem [resolvable:$true] %s244
          %250 = dma.hbm_to_vmem [thread:$0]  %s243, 512, %s245, %s234, 256, 256, 16
        $region40: #{tpu_custom_call.1} parent=35 // pred_fallthru
          _
      $region36: #{tpu_custom_call.1} parent=5 // pred_fallthru
        _
      %p251 = scmp.le.s32.totalorder 1, %s19
      %p252 = scmp.lt.s32.totalorder %s19, 3
      %p253 = pnand %p251, %p252
      %p254 = pneg %p253
      // Predicated region
      $region41: #{tpu_custom_call.1} parent=5 // pred_check
        _
      $region42: #{tpu_custom_call.1} parent=5 // pred_check_branch
        %256 = sbr.rel (%p253) target = $region44
      $region43: #{tpu_custom_call.1} parent=5 // pred_region
        %s257 = ssub.s32 %s19, 1
        %s258 = sand.u32 %s32, 1
        %s259 = scalar_lea.sflag [#allocation4], %s258
        %s260 = sand.u32 %s32, 1
        %s261 = smul.addr %s260, 32
        %s262 = scalar_lea.vmem [#allocation3], %s261
        // Predicated region
        $region45: #{tpu_custom_call.1} parent=43 // pred_check
          %p263 = pneg %p45
        $region46: #{tpu_custom_call.1} parent=43 // pred_check_branch
          %265 = sbr.rel (%p263) target = $region48
        $region47: #{tpu_custom_call.1} parent=43 // pred_region
          %266 = dma.done %s259, 512
        $region48: #{tpu_custom_call.1} parent=43 // pred_fallthru
          _
        // Predicated region
        $region49: #{tpu_custom_call.1} parent=43 // pred_check
          %p267 = pneg %p87
        $region50: #{tpu_custom_call.1} parent=43 // pred_check_branch
          %269 = sbr.rel (%p267) target = $region52
        $region51: #{tpu_custom_call.1} parent=43 // pred_region
          %270 = dma.done [#allocation7], 256
        $region52: #{tpu_custom_call.1} parent=43 // pred_fallthru
          _
        // Predicated region
        $region53: #{tpu_custom_call.1} parent=43 // pred_check
          %p271 = pneg %p108
        $region54: #{tpu_custom_call.1} parent=43 // pred_check_branch
          %273 = sbr.rel (%p271) target = $region56
        $region55: #{tpu_custom_call.1} parent=43 // pred_region
          %274 = dma.done [#allocation7], 128
        $region56: #{tpu_custom_call.1} parent=43 // pred_fallthru
          _
        %s275 = sand.u32 %s32, 1
        %s276 = scalar_lea.sflag [#allocation4], %s275
        %s277 = sand.u32 %s32, 1
        %s278 = smul.addr %s277, 32
        %s279 = scalar_lea.vmem [#allocation3], %s278
        %p280 = pneg %p45
        %p281 = pneg %p42
        %p282 = pneg %p66
        %p283 = pneg %p63
        %p284 = pneg %p87
        %p285 = pneg %p84
        %p286 = pneg %p108
        %p287 = pneg %p105
        %p288 = pneg %p129
        %p289 = pneg %p126
        %p290 = pneg %p150
        %p291 = pneg %p147
        %p292 = pneg %p176
        %p293 = pneg %p173
        %s294 = sand.u32 %s163, 1
        %s295 = scalar_lea.sflag [#allocation5], %s294
        %s296 = sand.u32 %s163, 1
        %s297 = smul.addr %s296, 32
        %s298 = scalar_lea.vmem [#allocation9], %s297
        %v300 = vld [vmem:[%s262] sm:$0xff]
        %v301 = vld [vmem:[%s262 + $0x8] sm:$0xff]
        %v302 = vld [vmem:[%s262 + $0x10] sm:$0xff]
        %v303 = vld [vmem:[%s262 + $0x18] sm:$0xff]
        %v304 = vld [vmem:[%s4] sm:$0xff]
        %v305 = vld [vmem:[%s4 + $0x8] sm:$0xff]
        %v306 = vld [vmem:[%s5] sm:$0xff]
        %v307 = vld [vmem:[%s5 + $0x8] sm:$0xff]
        %v308 = vld [vmem:[%s5 + $0x10] sm:$0x1]
        %v309 = vld [vmem:[%s5 + $0x18] sm:$0x1]
        %v310 = vld [vmem:[%s1] sm:$0xf]
        %v311 = vld [vmem:[%s1 + $0x4] sm:$0xf]
        %v312 = vpack.c.bf16 %v302, %v300
        %v313 = vpack.c.bf16 %v303, %v301
        %v316 = vunpack.c.l.b16 %v310
        %v317 = vunpack.c.l.b16 %v311
        %v318 = vpack.c.b16 %v317, %v316
        %vm319 = vcmask 130048
        %v321 = vsel %vm319, %v318, 0
        %323 = vmatprep.subr.bf16.mxu0 %v313
        %324 = vmatpush1.bf16.msra.mxu0 %v312
        %325 = vmatprep.subr.bf16.mxu0 0
        %326 = vmatpush1.bf16.msra.mxu0 0
        %327 = vmatprep.subr.bf16.mxu0 0
        %328 = vmatpush1.bf16.msra.mxu0 0
        %329 = vmatprep.subr.bf16.mxu0 0
        %330 = vmatpush1.bf16.msra.mxu0 0
        %331 = vmatprep.subr.bf16.mxu0 0
        %332 = vmatpush1.bf16.msra.mxu0 0
        %333 = vmatprep.subr.bf16.mxu0 0
        %334 = vmatpush1.bf16.msra.mxu0 0
        %335 = vmatprep.subr.bf16.mxu0 0
        %336 = vmatpush1.bf16.msra.mxu0 0
        %337 = vmatprep.subr.bf16.mxu0 0
        %338 = vmatpush1.bf16.msra.mxu0 0
        %339 = vmatprep.subr.bf16.mxu0 0
        %340 = vmatpush1.bf16.msra.mxu0 0
        %341 = vmatprep.subr.bf16.mxu0 0
        %342 = vmatpush1.bf16.msra.mxu0 0
        %343 = vmatprep.subr.bf16.mxu0 0
        %344 = vmatpush1.bf16.msra.mxu0 0
        %345 = vmatprep.subr.bf16.mxu0 0
        %346 = vmatpush1.bf16.msra.mxu0 0
        %347 = vmatprep.subr.bf16.mxu0 0
        %348 = vmatpush1.bf16.msra.mxu0 0
        %349 = vmatprep.subr.bf16.mxu0 0
        %350 = vmatpush1.bf16.msra.mxu0 0
        %351 = vmatprep.subr.bf16.mxu0 0
        %352 = vmatpush1.bf16.msra.mxu0 0
        %353 = vmatprep.subr.bf16.mxu0 0
        %354 = vmatpush1.bf16.msra.mxu0 0
        %355 = vmatprep.mubr.bf16.mxu0 0
        %356 = vmatmul.mubr.bf16.gmra.mrb[0].mxu0 %v321
        %v357 = vpop.f32.mrb[0].mxu0
        %v358 = vadd.f32 0.0, %v357
        %v359 = vpop.f32.mrb[0].mxu0
        %v360 = vadd.f32 0.0, %v359
        %v361 = vpop.f32.mrb[0].mxu0
        %v362 = vadd.f32 0.0, %v361
        %v363 = vpop.f32.mrb[0].mxu0
        %v364 = vadd.f32 0.0, %v363
        %365 = vdwg.mxu0
        %v366 = vadd.f32 %v358, %v360
        %367 = vadd.xlane.f32.xlu0 %v366
        %v368 = vpop.xlane.xlu0 %367
        %v369 = vadd.f32 %v362, %v364
        %370 = vadd.xlane.f32.xlu0 %v369
        %v371 = vpop.xlane.xlu0 %370
        %v372 = vmul.f32 %v368, 0.00390625
        %v373 = vmul.f32 %v371, 0.00390625
        %v374 = vmul.f32 %v358, %v358
        %v375 = vmul.f32 %v360, %v360
        %v376 = vmul.f32 %v362, %v362
        %v377 = vmul.f32 %v364, %v364
        %v378 = vadd.f32 %v374, %v375
        %379 = vadd.xlane.f32.xlu0 %v378
        %v380 = vpop.xlane.xlu0 %379
        %v381 = vadd.f32 %v376, %v377
        %382 = vadd.xlane.f32.xlu0 %v381
        %v383 = vpop.xlane.xlu0 %382
        %v384 = vmul.f32 %v380, 0.00390625
        %v385 = vmul.f32 %v383, 0.00390625
        %v386 = vmul.f32 %v372, %v372
        %v387 = vmul.f32 %v373, %v373
        %v388 = vsub.f32 %v384, %v386
        %v389 = vsub.f32 %v385, %v387
        %v390 = vsub.f32 %v358, %v372
        %v391 = vsub.f32 %v360, %v372
        %v392 = vsub.f32 %v362, %v373
        %v393 = vsub.f32 %v364, %v373
        %v394 = vadd.f32 %v388, 1e-05
        %v395 = vadd.f32 %v389, 1e-05
        %v396 = vrsqrt.pop %v394
        %v397 = vrsqrt.pop %v395
        %v398 = vmul.f32 %v390, %v396
        %v399 = vmul.f32 %v391, %v396
        %v400 = vmul.f32 %v392, %v397
        %v401 = vmul.f32 %v393, %v397
        %403 = vset.pattern.permute.xlu0 0
        %404 = vperm.xlu0 %403, %v304
        %v405 = vpop.permute.xlu0 %404
        %408 = vset.pattern.permute.xlu0 0
        %409 = vperm.xlu0 %408, %v305
        %v410 = vpop.permute.xlu0 %409
        %v412 = vmul.f32 %v398, %v405
        %v413 = vmul.f32 %v399, %v405
        %v414 = vmul.f32 %v400, %v410
        %v415 = vmul.f32 %v401, %v410
        %416 = vset.pattern.permute.xlu0 1
        %417 = vperm.xlu0 %416, %v304
        %v418 = vpop.permute.xlu0 %417
        %420 = vset.pattern.permute.xlu0 1
        %421 = vperm.xlu0 %420, %v305
        %v422 = vpop.permute.xlu0 %421
        %v424 = vadd.f32 %v412, %v418
        %v425 = vadd.f32 %v413, %v418
        %v426 = vadd.f32 %v414, %v422
        %v427 = vadd.f32 %v415, %v422
        %v428 = vmax.f32 %v424, 0.0
        %v429 = vmax.f32 %v425, 0.0
        %v430 = vmax.f32 %v426, 0.0
        %v431 = vmax.f32 %v427, 0.0
        %432 = vrot.lane.b32.xlu0 %v428, 17
        %v433 = vpop.permute.xlu0 %432
        %434 = vrot.lane.b32.xlu0 %v430, 17
        %v435 = vpop.permute.xlu0 %434
        %436 = vrot.lane.b32.xlu0 %v429, 17
        %v437 = vpop.permute.xlu0 %436
        %438 = vrot.lane.b32.xlu0 %v431, 17
        %v439 = vpop.permute.xlu0 %438
        %v440 = vlaneseq
        %v441 = vand.u32 %v440, 127
        %vm442 = vcmp.lt.s32.totalorder %v441, 17
        %v443 = vsel %vm442, %v433, %v437
        %v444 = vsel %vm442, %v435, %v439
        %v445 = vsel %vm442, %v437, %v433
        %v446 = vsel %vm442, %v439, %v435
        %v447 = vlaneseq
        %v448 = vshrl.u32 %v447, 7
        %v449 = vsub.s32 0, %v448
        %v450 = vrot.slane %v306, %v449
        %v451 = vlaneseq
        %v452 = vshrl.u32 %v451, 7
        %v453 = vsub.s32 0, %v452
        %v454 = vrot.slane %v307, %v453
        %v455 = vmul.f32 %v445, %v450
        %v456 = vmul.f32 %v443, %v454
        %v457 = vmul.f32 %v446, %v450
        %v458 = vmul.f32 %v444, %v454
        %v459 = vpack.c.bf16 %v457, %v455
        %v460 = vpack.c.bf16 %v458, %v456
        %461 = vst [vmem:[#allocation2] sm:$0xff] %v459
        %462 = vst [vmem:[#allocation2 + $0x8] sm:$0xff] %v460
        %463 = vrot.lane.b32.xlu0 %v428, 16
        %v464 = vpop.permute.xlu0 %463
        %465 = vrot.lane.b32.xlu0 %v430, 16
        %v466 = vpop.permute.xlu0 %465
        %467 = vrot.lane.b32.xlu0 %v429, 16
        %v468 = vpop.permute.xlu0 %467
        %469 = vrot.lane.b32.xlu0 %v431, 16
        %v470 = vpop.permute.xlu0 %469
        %vm471 = vcmp.lt.s32.totalorder %v441, 16
        %v472 = vsel %vm471, %v464, %v468
        %v473 = vsel %vm471, %v466, %v470
        %v474 = vsel %vm471, %v468, %v464
        %v475 = vsel %vm471, %v470, %v466
        %v476 = vlaneseq
        %v477 = vshrl.u32 %v476, 7
        %v478 = vsub.s32 1, %v477
        %v479 = vrot.slane %v306, %v478
        %v480 = vlaneseq
        %v481 = vshrl.u32 %v480, 7
        %v482 = vsub.s32 1, %v481
        %v483 = vrot.slane %v307, %v482
        %v484 = vmul.f32 %v474, %v479
        %v485 = vmul.f32 %v472, %v483
        %v486 = vmul.f32 %v475, %v479
        %v487 = vmul.f32 %v473, %v483
        %v488 = vpack.c.bf16 %v486, %v484
        %v489 = vpack.c.bf16 %v487, %v485
        %490 = vst [vmem:[#allocation2 + $0x10] sm:$0xff] %v488
        %491 = vst [vmem:[#allocation2 + $0x18] sm:$0xff] %v489
        %492 = vrot.lane.b32.xlu0 %v428, 15
        %v493 = vpop.permute.xlu0 %492
        %494 = vrot.lane.b32.xlu0 %v430, 15
        %v495 = vpop.permute.xlu0 %494
        %496 = vrot.lane.b32.xlu0 %v429, 15
        %v497 = vpop.permute.xlu0 %496
        %498 = vrot.lane.b32.xlu0 %v431, 15
        %v499 = vpop.permute.xlu0 %498
        %vm500 = vcmp.lt.s32.totalorder %v441, 15
        %v501 = vsel %vm500, %v493, %v497
        %v502 = vsel %vm500, %v495, %v499
        %v503 = vsel %vm500, %v497, %v493
        %v504 = vsel %vm500, %v499, %v495
        %v505 = vlaneseq
        %v506 = vshrl.u32 %v505, 7
        %v507 = vsub.s32 2, %v506
        %v508 = vrot.slane %v306, %v507
        %v509 = vlaneseq
        %v510 = vshrl.u32 %v509, 7
        %v511 = vsub.s32 2, %v510
        %v512 = vrot.slane %v307, %v511
        %v513 = vmul.f32 %v503, %v508
        %v514 = vmul.f32 %v501, %v512
        %v515 = vmul.f32 %v504, %v508
        %v516 = vmul.f32 %v502, %v512
        %v517 = vpack.c.bf16 %v515, %v513
        %v518 = vpack.c.bf16 %v516, %v514
        %519 = vst [vmem:[#allocation2 + $0x20] sm:$0xff] %v517
        %520 = vst [vmem:[#allocation2 + $0x28] sm:$0xff] %v518
        %521 = vrot.lane.b32.xlu0 %v428, 1
        %v522 = vpop.permute.xlu0 %521
        %523 = vrot.lane.b32.xlu0 %v430, 1
        %v524 = vpop.permute.xlu0 %523
        %525 = vrot.lane.b32.xlu0 %v429, 1
        %v526 = vpop.permute.xlu0 %525
        %527 = vrot.lane.b32.xlu0 %v431, 1
        %v528 = vpop.permute.xlu0 %527
        %vm529 = vcmp.lt.s32.totalorder %v441, 1
        %v530 = vsel %vm529, %v522, %v526
        %v531 = vsel %vm529, %v524, %v528
        %v532 = vsel %vm529, %v526, %v522
        %v533 = vsel %vm529, %v528, %v524
        %v534 = vlaneseq
        %v535 = vshrl.u32 %v534, 7
        %v536 = vsub.s32 3, %v535
        %v537 = vrot.slane %v306, %v536
        %v538 = vlaneseq
        %v539 = vshrl.u32 %v538, 7
        %v540 = vsub.s32 3, %v539
        %v541 = vrot.slane %v307, %v540
        %v542 = vmul.f32 %v532, %v537
        %v543 = vmul.f32 %v530, %v541
        %v544 = vmul.f32 %v533, %v537
        %v545 = vmul.f32 %v531, %v541
        %v546 = vpack.c.bf16 %v544, %v542
        %v547 = vpack.c.bf16 %v545, %v543
        %548 = vst [vmem:[#allocation2 + $0x30] sm:$0xff] %v546
        %549 = vst [vmem:[#allocation2 + $0x38] sm:$0xff] %v547
        %v550 = vpack.c.bf16 %v430, %v428
        %v551 = vpack.c.bf16 %v431, %v429
        %552 = vst [vmem:[#allocation2 + $0x40] sm:$0xff] %v550
        %553 = vst [vmem:[#allocation2 + $0x48] sm:$0xff] %v551
        %554 = vrot.lane.b32.xlu0 %v428, 127
        %v555 = vpop.permute.xlu0 %554
        %556 = vrot.lane.b32.xlu0 %v430, 127
        %v557 = vpop.permute.xlu0 %556
        %558 = vrot.lane.b32.xlu0 %v429, 127
        %v559 = vpop.permute.xlu0 %558
        %560 = vrot.lane.b32.xlu0 %v431, 127
        %v561 = vpop.permute.xlu0 %560
        %vm562 = vcmp.lt.s32.totalorder %v441, 127
        %v563 = vsel %vm562, %v555, %v559
        %v564 = vsel %vm562, %v557, %v561
        %v565 = vsel %vm562, %v559, %v555
        %v566 = vsel %vm562, %v561, %v557
        %v567 = vlaneseq
        %v568 = vshrl.u32 %v567, 7
        %v569 = vsub.s32 5, %v568
        %v570 = vrot.slane %v306, %v569
        %v571 = vlaneseq
        %v572 = vshrl.u32 %v571, 7
        %v573 = vsub.s32 5, %v572
        %v574 = vrot.slane %v307, %v573
        %v575 = vmul.f32 %v563, %v570
        %v576 = vmul.f32 %v565, %v574
        %v577 = vmul.f32 %v564, %v570
        %v578 = vmul.f32 %v566, %v574
        %v579 = vpack.c.bf16 %v577, %v575
        %v580 = vpack.c.bf16 %v578, %v576
        %581 = vst [vmem:[#allocation2 + $0x50] sm:$0xff] %v579
        %582 = vst [vmem:[#allocation2 + $0x58] sm:$0xff] %v580
        %583 = vrot.lane.b32.xlu0 %v428, 113
        %v584 = vpop.permute.xlu0 %583
        %585 = vrot.lane.b32.xlu0 %v430, 113
        %v586 = vpop.permute.xlu0 %585
        %587 = vrot.lane.b32.xlu0 %v429, 113
        %v588 = vpop.permute.xlu0 %587
        %589 = vrot.lane.b32.xlu0 %v431, 113
        %v590 = vpop.permute.xlu0 %589
        %vm591 = vcmp.lt.s32.totalorder %v441, 113
        %v592 = vsel %vm591, %v584, %v588
        %v593 = vsel %vm591, %v586, %v590
        %v594 = vsel %vm591, %v588, %v584
        %v595 = vsel %vm591, %v590, %v586
        %v596 = vlaneseq
        %v597 = vshrl.u32 %v596, 7
        %v598 = vsub.s32 6, %v597
        %v599 = vrot.slane %v306, %v598
        %v600 = vlaneseq
        %v601 = vshrl.u32 %v600, 7
        %v602 = vsub.s32 6, %v601
        %v603 = vrot.slane %v307, %v602
        %v604 = vmul.f32 %v592, %v599
        %v605 = vmul.f32 %v594, %v603
        %v606 = vmul.f32 %v593, %v599
        %v607 = vmul.f32 %v595, %v603
        %v608 = vpack.c.bf16 %v606, %v604
        %v609 = vpack.c.bf16 %v607, %v605
        %610 = vst [vmem:[#allocation2 + $0x60] sm:$0xff] %v608
        %611 = vst [vmem:[#allocation2 + $0x68] sm:$0xff] %v609
        %612 = vrot.lane.b32.xlu0 %v428, 112
        %v613 = vpop.permute.xlu0 %612
        %614 = vrot.lane.b32.xlu0 %v430, 112
        %v615 = vpop.permute.xlu0 %614
        %616 = vrot.lane.b32.xlu0 %v429, 112
        %v617 = vpop.permute.xlu0 %616
        %618 = vrot.lane.b32.xlu0 %v431, 112
        %v619 = vpop.permute.xlu0 %618
        %vm620 = vcmp.lt.s32.totalorder %v441, 112
        %v621 = vsel %vm620, %v613, %v617
        %v622 = vsel %vm620, %v615, %v619
        %v623 = vsel %vm620, %v617, %v613
        %v624 = vsel %vm620, %v619, %v615
        %v625 = vlaneseq
        %v626 = vshrl.u32 %v625, 7
        %v627 = vsub.s32 7, %v626
        %v628 = vrot.slane %v306, %v627
        %v629 = vlaneseq
        %v630 = vshrl.u32 %v629, 7
        %v631 = vsub.s32 7, %v630
        %v632 = vrot.slane %v307, %v631
        %v633 = vmul.f32 %v621, %v628
        %v634 = vmul.f32 %v623, %v632
        %v635 = vmul.f32 %v622, %v628
        %v636 = vmul.f32 %v624, %v632
        %v637 = vpack.c.bf16 %v635, %v633
        %v638 = vpack.c.bf16 %v636, %v634
        %639 = vst [vmem:[#allocation2 + $0x70] sm:$0xff] %v637
        %640 = vst [vmem:[#allocation2 + $0x78] sm:$0xff] %v638
        %641 = vrot.lane.b32.xlu0 %v428, 111
        %v642 = vpop.permute.xlu0 %641
        %643 = vrot.lane.b32.xlu0 %v430, 111
        %v644 = vpop.permute.xlu0 %643
        %645 = vrot.lane.b32.xlu0 %v429, 111
        %v646 = vpop.permute.xlu0 %645
        %647 = vrot.lane.b32.xlu0 %v431, 111
        %v648 = vpop.permute.xlu0 %647
        %vm649 = vcmp.lt.s32.totalorder %v441, 111
        %v650 = vsel %vm649, %v642, %v646
        %v651 = vsel %vm649, %v644, %v648
        %v652 = vsel %vm649, %v646, %v642
        %v653 = vsel %vm649, %v648, %v644
        %v654 = vlaneseq
        %v655 = vshrl.u32 %v654, 7
        %v656 = vsub.s32 0, %v655
        %v657 = vrot.slane %v308, %v656
        %v658 = vlaneseq
        %v659 = vshrl.u32 %v658, 7
        %v660 = vsub.s32 0, %v659
        %v661 = vrot.slane %v309, %v660
        %v662 = vmul.f32 %v650, %v657
        %v663 = vmul.f32 %v652, %v661
        %v664 = vmul.f32 %v651, %v657
        %v665 = vmul.f32 %v653, %v661
        %v666 = vpack.c.bf16 %v664, %v662
        %v667 = vpack.c.bf16 %v665, %v663
        %668 = vst [vmem:[#allocation2 + $0x80] sm:$0xff] %v666
        %669 = vst [vmem:[#allocation2 + $0x88] sm:$0xff] %v667
        %v670 = vld [vmem:[#allocation6] sm:$0xff]
        %v671 = vld [vmem:[#allocation6 + $0x8] sm:$0xff]
        %v672 = vld [vmem:[#allocation2] sm:$0xff]
        %v673 = vld [vmem:[#allocation2 + $0x8] sm:$0xff]
        %v674 = vld [vmem:[#allocation2 + $0x10] sm:$0xff]
        %v675 = vld [vmem:[#allocation2 + $0x18] sm:$0xff]
        %v676 = vld [vmem:[#allocation2 + $0x20] sm:$0xff]
        %v677 = vld [vmem:[#allocation2 + $0x28] sm:$0xff]
        %v678 = vld [vmem:[#allocation2 + $0x30] sm:$0xff]
        %v679 = vld [vmem:[#allocation2 + $0x38] sm:$0xff]
        %v680 = vld [vmem:[#allocation2 + $0x40] sm:$0xff]
        %v681 = vld [vmem:[#allocation2 + $0x48] sm:$0xff]
        %v682 = vld [vmem:[#allocation2 + $0x50] sm:$0xff]
        %v683 = vld [vmem:[#allocation2 + $0x58] sm:$0xff]
        %v684 = vld [vmem:[#allocation2 + $0x60] sm:$0xff]
        %v685 = vld [vmem:[#allocation2 + $0x68] sm:$0xff]
        %v686 = vld [vmem:[#allocation2 + $0x70] sm:$0xff]
        %v687 = vld [vmem:[#allocation2 + $0x78] sm:$0xff]
        %v688 = vld [vmem:[#allocation2 + $0x80] sm:$0xff]
        %v689 = vld [vmem:[#allocation2 + $0x88] sm:$0xff]
        %v692 = vunpack.c.l.b16 %v670
        %v693 = vunpack.c.h.b16 %v670
        %v694 = vunpack.c.l.b16 %v671
        %v695 = vunpack.c.h.b16 %v671
        %v696 = vpack.c.b16 %v694, %v692
        %v697 = vpack.c.b16 %v695, %v693
        %v700 = vsel %vm319, %v697, 0
        %702 = vmatprep.subr.bf16.mxu0 %v673
        %703 = vmatpush1.bf16.msra.mxu0 %v672
        %704 = vmatprep.subr.bf16.mxu0 %v675
        %705 = vmatpush1.bf16.msra.mxu0 %v674
        %706 = vmatprep.subr.bf16.mxu0 %v677
        %707 = vmatpush1.bf16.msra.mxu0 %v676
        %708 = vmatprep.subr.bf16.mxu0 %v679
        %709 = vmatpush1.bf16.msra.mxu0 %v678
        %710 = vmatprep.subr.bf16.mxu0 %v681
        %711 = vmatpush1.bf16.msra.mxu0 %v680
        %712 = vmatprep.subr.bf16.mxu0 %v683
        %713 = vmatpush1.bf16.msra.mxu0 %v682
        %714 = vmatprep.subr.bf16.mxu0 %v685
        %715 = vmatpush1.bf16.msra.mxu0 %v684
        %716 = vmatprep.subr.bf16.mxu0 %v687
        %717 = vmatpush1.bf16.msra.mxu0 %v686
        %718 = vmatprep.subr.bf16.mxu0 %v689
        %719 = vmatpush1.bf16.msra.mxu0 %v688
        %720 = vmatprep.subr.bf16.mxu0 0
        %721 = vmatpush1.bf16.msra.mxu0 0
        %722 = vmatprep.subr.bf16.mxu0 0
        %723 = vmatpush1.bf16.msra.mxu0 0
        %724 = vmatprep.subr.bf16.mxu0 0
        %725 = vmatpush1.bf16.msra.mxu0 0
        %726 = vmatprep.subr.bf16.mxu0 0
        %727 = vmatpush1.bf16.msra.mxu0 0
        %728 = vmatprep.subr.bf16.mxu0 0
        %729 = vmatpush1.bf16.msra.mxu0 0
        %730 = vmatprep.subr.bf16.mxu0 0
        %731 = vmatpush1.bf16.msra.mxu0 0
        %732 = vmatprep.subr.bf16.mxu0 0
        %733 = vmatpush1.bf16.msra.mxu0 0
        %734 = vmatprep.mubr.bf16.mxu0 %v700
        %735 = vmatmul.mubr.bf16.gmra.mrb[0].mxu0 %v696
        %v736 = vpop.f32.mrb[0].mxu0
        %v737 = vadd.f32 0.0, %v736
        %v738 = vpop.f32.mrb[0].mxu0
        %v739 = vadd.f32 0.0, %v738
        %v740 = vpop.f32.mrb[0].mxu0
        %v741 = vadd.f32 0.0, %v740
        %v742 = vpop.f32.mrb[0].mxu0
        %v743 = vadd.f32 0.0, %v742
        %744 = vdwg.mxu0
        %v745 = vadd.f32 %v737, %v739
        %746 = vadd.xlane.f32.xlu0 %v745
        %v747 = vpop.xlane.xlu0 %746
        %v748 = vadd.f32 %v741, %v743
        %749 = vadd.xlane.f32.xlu0 %v748
        %v750 = vpop.xlane.xlu0 %749
        %v751 = vmul.f32 %v747, 0.00390625
        %v752 = vmul.f32 %v750, 0.00390625
        %v753 = vmul.f32 %v737, %v737
        %v754 = vmul.f32 %v739, %v739
        %v755 = vmul.f32 %v741, %v741
        %v756 = vmul.f32 %v743, %v743
        %v757 = vadd.f32 %v753, %v754
        %758 = vadd.xlane.f32.xlu0 %v757
        %v759 = vpop.xlane.xlu0 %758
        %v760 = vadd.f32 %v755, %v756
        %761 = vadd.xlane.f32.xlu0 %v760
        %v762 = vpop.xlane.xlu0 %761
        %v763 = vmul.f32 %v759, 0.00390625
        %v764 = vmul.f32 %v762, 0.00390625
        %v765 = vmul.f32 %v751, %v751
        %v766 = vmul.f32 %v752, %v752
        %v767 = vsub.f32 %v763, %v765
        %v768 = vsub.f32 %v764, %v766
        %v769 = vsub.f32 %v737, %v751
        %v770 = vsub.f32 %v739, %v751
        %v771 = vsub.f32 %v741, %v752
        %v772 = vsub.f32 %v743, %v752
        %v773 = vadd.f32 %v767, 1e-05
        %v774 = vadd.f32 %v768, 1e-05
        %v775 = vrsqrt.pop %v773
        %v776 = vrsqrt.pop %v774
        %v777 = vmul.f32 %v769, %v775
        %v778 = vmul.f32 %v770, %v775
        %v779 = vmul.f32 %v771, %v776
        %v780 = vmul.f32 %v772, %v776
        %781 = vset.pattern.permute.xlu0 2
        %782 = vperm.xlu0 %781, %v304
        %v783 = vpop.permute.xlu0 %782
        %785 = vset.pattern.permute.xlu0 2
        %786 = vperm.xlu0 %785, %v305
        %v787 = vpop.permute.xlu0 %786
        %v789 = vmul.f32 %v777, %v783
        %v790 = vmul.f32 %v778, %v783
        %v791 = vmul.f32 %v779, %v787
        %v792 = vmul.f32 %v780, %v787
        %793 = vset.pattern.permute.xlu0 3
        %794 = vperm.xlu0 %793, %v304
        %v795 = vpop.permute.xlu0 %794
        %797 = vset.pattern.permute.xlu0 3
        %798 = vperm.xlu0 %797, %v305
        %v799 = vpop.permute.xlu0 %798
        %v801 = vadd.f32 %v789, %v795
        %v802 = vadd.f32 %v790, %v795
        %v803 = vadd.f32 %v791, %v799
        %v804 = vadd.f32 %v792, %v799
        %v805 = vmax.f32 %v801, 0.0
        %v806 = vmax.f32 %v802, 0.0
        %v807 = vmax.f32 %v803, 0.0
        %v808 = vmax.f32 %v804, 0.0
        %v809 = vld [vmem:[#allocation8] sm:$0xf]
        %v810 = vld [vmem:[#allocation8 + $0x4] sm:$0xf]
        %v811 = vpack.c.bf16 %v807, %v805
        %v812 = vpack.c.bf16 %v808, %v806
        %v815 = vunpack.c.l.b16 %v809
        %v816 = vunpack.c.l.b16 %v810
        %v817 = vpack.c.b16 %v816, %v815
        %v819 = vsel %vm319, %v817, 0
        %821 = vmatprep.subr.bf16.mxu0 %v812
        %822 = vmatpush1.bf16.msra.mxu0 %v811
        %823 = vmatprep.subr.bf16.mxu0 0
        %824 = vmatpush1.bf16.msra.mxu0 0
        %825 = vmatprep.subr.bf16.mxu0 0
        %826 = vmatpush1.bf16.msra.mxu0 0
        %827 = vmatprep.subr.bf16.mxu0 0
        %828 = vmatpush1.bf16.msra.mxu0 0
        %829 = vmatprep.subr.bf16.mxu0 0
        %830 = vmatpush1.bf16.msra.mxu0 0
        %831 = vmatprep.subr.bf16.mxu0 0
        %832 = vmatpush1.bf16.msra.mxu0 0
        %833 = vmatprep.subr.bf16.mxu0 0
        %834 = vmatpush1.bf16.msra.mxu0 0
        %835 = vmatprep.subr.bf16.mxu0 0
        %836 = vmatpush1.bf16.msra.mxu0 0
        %837 = vmatprep.subr.bf16.mxu0 0
        %838 = vmatpush1.bf16.msra.mxu0 0
        %839 = vmatprep.subr.bf16.mxu0 0
        %840 = vmatpush1.bf16.msra.mxu0 0
        %841 = vmatprep.subr.bf16.mxu0 0
        %842 = vmatpush1.bf16.msra.mxu0 0
        %843 = vmatprep.subr.bf16.mxu0 0
        %844 = vmatpush1.bf16.msra.mxu0 0
        %845 = vmatprep.subr.bf16.mxu0 0
        %846 = vmatpush1.bf16.msra.mxu0 0
        %847 = vmatprep.subr.bf16.mxu0 0
        %848 = vmatpush1.bf16.msra.mxu0 0
        %849 = vmatprep.subr.bf16.mxu0 0
        %850 = vmatpush1.bf16.msra.mxu0 0
        %851 = vmatprep.subr.bf16.mxu0 0
        %852 = vmatpush1.bf16.msra.mxu0 0
        %853 = vmatprep.mubr.bf16.mxu0 0
        %854 = vmatmul.mubr.bf16.gmra.mrb[0].mxu0 %v819
        %v855 = vpop.f32.mrb[0].mxu0
        %v856 = vadd.f32 0.0, %v855
        %v857 = vpop.f32.mrb[0].mxu0
        %v858 = vadd.f32 0.0, %v857
        %v859 = vpop.f32.mrb[0].mxu0
        %v860 = vadd.f32 0.0, %v859
        %v861 = vpop.f32.mrb[0].mxu0
        %v862 = vadd.f32 0.0, %v861
        %863 = vdwg.mxu0
        %v864 = vadd.f32 %v856, %v858
        %865 = vadd.xlane.f32.xlu0 %v864
        %v866 = vpop.xlane.xlu0 %865
        %v867 = vadd.f32 %v860, %v862
        %868 = vadd.xlane.f32.xlu0 %v867
        %v869 = vpop.xlane.xlu0 %868
        %v870 = vmul.f32 %v866, 0.00390625
        %v871 = vmul.f32 %v869, 0.00390625
        %v872 = vmul.f32 %v856, %v856
        %v873 = vmul.f32 %v858, %v858
        %v874 = vmul.f32 %v860, %v860
        %v875 = vmul.f32 %v862, %v862
        %v876 = vadd.f32 %v872, %v873
        %877 = vadd.xlane.f32.xlu0 %v876
        %v878 = vpop.xlane.xlu0 %877
        %v879 = vadd.f32 %v874, %v875
        %880 = vadd.xlane.f32.xlu0 %v879
        %v881 = vpop.xlane.xlu0 %880
        %v882 = vmul.f32 %v878, 0.00390625
        %v883 = vmul.f32 %v881, 0.00390625
        %v884 = vmul.f32 %v870, %v870
        %v885 = vmul.f32 %v871, %v871
        %v886 = vsub.f32 %v882, %v884
        %v887 = vsub.f32 %v883, %v885
        %v888 = vsub.f32 %v856, %v870
        %v889 = vsub.f32 %v858, %v870
        %v890 = vsub.f32 %v860, %v871
        %v891 = vsub.f32 %v862, %v871
        %v892 = vadd.f32 %v886, 1e-05
        %v893 = vadd.f32 %v887, 1e-05
        %v894 = vrsqrt.pop %v892
        %v895 = vrsqrt.pop %v893
        %v896 = vmul.f32 %v888, %v894
        %v897 = vmul.f32 %v889, %v894
        %v898 = vmul.f32 %v890, %v895
        %v899 = vmul.f32 %v891, %v895
        %900 = vset.pattern.permute.xlu0 4
        %901 = vperm.xlu0 %900, %v304
        %v902 = vpop.permute.xlu0 %901
        %904 = vset.pattern.permute.xlu0 4
        %905 = vperm.xlu0 %904, %v305
        %v906 = vpop.permute.xlu0 %905
        %v908 = vmul.f32 %v896, %v902
        %v909 = vmul.f32 %v897, %v902
        %v910 = vmul.f32 %v898, %v906
        %v911 = vmul.f32 %v899, %v906
        %912 = vset.pattern.permute.xlu0 5
        %913 = vperm.xlu0 %912, %v304
        %v914 = vpop.permute.xlu0 %913
        %916 = vset.pattern.permute.xlu0 5
        %917 = vperm.xlu0 %916, %v305
        %v918 = vpop.permute.xlu0 %917
        %v920 = vadd.f32 %v908, %v914
        %v921 = vadd.f32 %v909, %v914
        %v922 = vadd.f32 %v910, %v918
        %v923 = vadd.f32 %v911, %v918
        %v924 = vadd.f32 %v920, %v300
        %v925 = vadd.f32 %v921, %v301
        %v926 = vadd.f32 %v922, %v302
        %v927 = vadd.f32 %v923, %v303
        %928 = vst [vmem:[%s298] sm:$0xff] %v924
        %929 = vst [vmem:[%s298 + $0x8] sm:$0xff] %v925
        %930 = vst [vmem:[%s298 + $0x10] sm:$0xff] %v926
        %931 = vst [vmem:[%s298 + $0x18] sm:$0xff] %v927
        %s932 = sand.u32 %s163, 1
        %s933 = scalar_lea.sflag [#allocation5], %s932
        %s934 = sand.u32 %s163, 1
        %s935 = smul.addr %s934, 32
        %s936 = scalar_lea.vmem [#allocation9], %s935
        // Predicated region
        $region57: #{tpu_custom_call.1} parent=43 // pred_check
          %p937 = pneg %p173
        $region58: #{tpu_custom_call.1} parent=43 // pred_check_branch
          %939 = sbr.rel (%p937) target = $region60
        $region59: #{tpu_custom_call.1} parent=43 // pred_region
          %s941 = ssub.s32 512, 512
          %942 = vsyncadd %s933, %s941
          %s943 = smul.addr %s24, 4
          %s944 = smul.addr %s943, 128
          %s945 = scalar_lea.hbm %s6, %s944
          %s946 = sshll.u32 %s936, 4
          %s947 = int_to_ptr.vmem [resolvable:$true] %s946
          %952 = dma.vmem_to_hbm [thread:$0]  %s947, 512, %s945, %s933, 256, 256, 16
        $region60: #{tpu_custom_call.1} parent=43 // pred_fallthru
          _
      $region44: #{tpu_custom_call.1} parent=5 // pred_fallthru
        _
      %p953 = scmp.le.s32.totalorder 2, %s19
      // Predicated region
      $region61: #{tpu_custom_call.1} parent=5 // pred_check
        %p954 = pneg %p953
      $region62: #{tpu_custom_call.1} parent=5 // pred_check_branch
        %956 = sbr.rel (%p954) target = $region64
      $region63: #{tpu_custom_call.1} parent=5 // pred_region
        %s957 = ssub.s32 %s19, 2
        // Predicated region
        $region65: #{tpu_custom_call.1} parent=63 // pred_check
          %p958 = pneg %p179
        $region66: #{tpu_custom_call.1} parent=63 // pred_check_branch
          %960 = sbr.rel (%p958) target = $region68
        $region67: #{tpu_custom_call.1} parent=63 // pred_region
          %s961 = sand.u32 %s164, 1
          %s962 = scalar_lea.sflag [#allocation5], %s961
          %s963 = sand.u32 %s164, 1
          %s964 = smul.addr %s963, 32
          %s965 = scalar_lea.vmem [#allocation9], %s964
          %966 = dma.done %s962, 512
        $region68: #{tpu_custom_call.1} parent=63 // pred_fallthru
          _
      $region64: #{tpu_custom_call.1} parent=5 // pred_fallthru
        _
    $region6: #{tpu_custom_call.1} parent=1 // loop_footer
      %s23 = sadd.s32 1, %s19
    $region7: #{tpu_custom_call.1} parent=1 // loop_footer_branch
      %18 = sbr.rel target = $region3
    $region8: #{tpu_custom_call.1} parent=1 // loop_exit
      _
    %967 = vsyncpa [#allocation4], 1
    %s968 = scalar_lea.sflag [#allocation4], 1
    %969 = vsyncpa %s968, 1
    %970 = vsyncpa [#allocation7], 1
    %971 = vsyncpa [#allocation5], 1
    %s972 = scalar_lea.sflag [#allocation5], 1
    %973 = vsyncpa %s972, 1

</llo_original>
